<compile_context>
chip_gen: v7x
topology: tpu7x:2x2x1
jax: 0.10.0
libtpu: 0.0.40
codegen_flags: <defaults>
</compile_context>

<pallas_src>
import functools
from typing import NamedTuple

import jax
import jax.numpy as jnp
from jax.experimental import pallas as pl
from jax.experimental.pallas import tpu as pltpu


# ---------------------------------------------------------------------------
# Kernels
# ---------------------------------------------------------------------------
def _linear_head_kernel_single(x_ref, w_ref, b_ref, o_ref, *, compute_dtype):
    """Single K-step: y = x @ w + b written directly (no accumulator scratch)."""
    a = x_ref[...].astype(compute_dtype)          # [tm, tk]
    w = w_ref[...].astype(compute_dtype)          # [tk, tn]  (weight already [E, D])
    y = jnp.dot(a, w, preferred_element_type=jnp.float32) + b_ref[...]
    o_ref[...] = y.astype(o_ref.dtype)


def _linear_head_kernel_multi(x_ref, w_ref, b_ref, o_ref, acc_ref, *, compute_dtype):
    """K-innermost accumulation with a resident f32 VMEM accumulator."""
    k = pl.program_id(2)

    @pl.when(k == 0)
    def _init():
        acc_ref[...] = jnp.zeros_like(acc_ref)

    a = x_ref[...].astype(compute_dtype)          # [tm, tk]
    w = w_ref[...].astype(compute_dtype)          # [tk, tn]
    acc_ref[...] += jnp.dot(a, w, preferred_element_type=jnp.float32)

    @pl.when(k == pl.num_programs(2) - 1)
    def _epilogue():
        o_ref[...] = (acc_ref[...] + b_ref[...]).astype(o_ref.dtype)


# ---------------------------------------------------------------------------
# Tiling helpers
# ---------------------------------------------------------------------------
def _round_up(x, m):
    return ((x + m - 1) // m) * m


def _pick_tile(dim, cap, align):
    """Largest multiple of `align` that divides `dim` and is <= cap.
    Assumes dim % align == 0."""
    t = min(cap, dim)
    t -= t % align
    while t > align and dim % t:
        t -= align
    return max(t, align)


class LinearHeadParams(NamedTuple):
    w_t: jax.Array      # [Ep, Dp] pre-transposed (and padded) weight
    b: jax.Array        # [1, Dp] f32 bias
    d_out: int          # original D (for output slicing)
    e_in: int           # original E (sanity check vs x)
    tn: int             # output-feature tile
    tk: int             # contraction tile


def prepare_linear_head(weight, bias, *, tn=None, tk=None, param_dtype=None):
    """One-time parameter prep (transpose + pad) — do this OUTSIDE the hot path.

    weight: [D, E] (PyTorch nn.Linear layout), bias: [D].
    """
    D, E = weight.shape

    # Contraction tile: divide E exactly if it is 128-aligned, otherwise use the
    # full E as a single block (legal via the block-equals-full-dim rule).
    if tk is None:
        tk = _pick_tile(E, 512, 128) if E % 128 == 0 else E
    Ep = _round_up(E, tk)

    # Output-feature tile: lane-dense (multiple of 128); D padding is one-time.
    if tn is None:
        Dp = _round_up(D, 128)
        tn = _pick_tile(Dp, 1024, 128)
    else:
        Dp = _round_up(D, tn)

    w_t = jnp.transpose(weight)                               # [E, D], once
    if (Ep, Dp) != (E, D):
        w_t = jnp.pad(w_t, ((0, Ep - E), (0, Dp - D)))        # once, at init
    if param_dtype is not None:
        w_t = w_t.astype(param_dtype)                         # e.g. bf16 W stream

    b = bias.astype(jnp.float32)                              # f32 bias add
    if Dp != D:
        b = jnp.pad(b, (0, Dp - D))
    b = b.reshape(1, Dp)

    return LinearHeadParams(w_t=w_t, b=b, d_out=D, e_in=E, tn=tn, tk=tk)


# ---------------------------------------------------------------------------
# Forward pass
# ---------------------------------------------------------------------------
def linear_head_apply(x, params: LinearHeadParams, *, tm=None, mxu_dtype=None):
    """y = x @ W^T + b with pre-prepared params.  x: [B, E] -> [B, D]."""
    B, E = x.shape
    if E != params.e_in:
        raise ValueError(f"x feature dim {E} != prepared embed size {params.e_in}")

    w_t, b, D, _, tn, tk = params
    Ep, Dp = w_t.shape
    out_dtype = x.dtype
    compute_dtype = mxu_dtype if mxu_dtype is not None else x.dtype

    # Batch tiling: avoid per-call padding of x whenever possible.
    if tm is None:
        if B % 8 == 0:
            tm, Bp = _pick_tile(B, 256, 8), B
        elif B <= 256:
            tm, Bp = B, B                      # full-dim block, no padding
        else:
            tm, Bp = 256, _round_up(B, 256)    # rare fallback: pad rows
    else:
        Bp = _round_up(B, tm)

    xp = x
    if (Bp, Ep) != (B, E):
        xp = jnp.pad(x, ((0, Bp - B), (0, Ep - E)))   # only hit in fallback cases

    nk = Ep // tk
    x_item = xp.dtype.itemsize
    w_item = w_t.dtype.itemsize
    o_item = jnp.dtype(out_dtype).itemsize

    if nk == 1:
        grid = (Bp // tm, Dp // tn)
        kernel = functools.partial(_linear_head_kernel_single,
                                   compute_dtype=compute_dtype)
        in_specs = [
            pl.BlockSpec((tm, tk), lambda i, j: (i, 0)),   # x
            pl.BlockSpec((tk, tn), lambda i, j: (0, j)),   # W^T  [E, D]
            pl.BlockSpec((1, tn), lambda i, j: (0, j)),    # bias
        ]
        out_specs = pl.BlockSpec((tm, tn), lambda i, j: (i, j))
        scratch = []
        dims = ("parallel", "parallel")
    else:
        grid = (Bp // tm, Dp // tn, nk)
        kernel = functools.partial(_linear_head_kernel_multi,
                                   compute_dtype=compute_dtype)
        in_specs = [
            pl.BlockSpec((tm, tk), lambda i, j, k: (i, k)),   # x
            pl.BlockSpec((tk, tn), lambda i, j, k: (k, j)),   # W^T  [E, D]
            pl.BlockSpec((1, tn), lambda i, j, k: (0, j)),    # bias
        ]
        out_specs = pl.BlockSpec((tm, tn), lambda i, j, k: (i, j))
        scratch = [pltpu.VMEM((tm, tn), jnp.float32)]
        dims = ("parallel", "parallel", "arbitrary")

    # VMEM budget: double-buffered tiles + accumulator, clamped to a range that
    # is safe on v7x (64 MiB physical) and above v5e's 16 MiB scoped default.
    tile_bytes = 2 * (tm * tk * x_item + tk * tn * w_item + tm * tn * o_item
                      + tn * 4) + (tm * tn * 4 if nk > 1 else 0)
    vmem_limit = min(48 * 1024 * 1024, max(32 * 1024 * 1024, int(tile_bytes * 2)))

    # x is re-read once per output-column tile, W once per batch tile.
    bytes_accessed = (Bp * Ep * x_item * (Dp // tn)
                      + Ep * Dp * w_item * (Bp // tm)
                      + Bp * Dp * o_item
                      + Dp * 4 * (Bp // tm))

    out = pl.pallas_call(
        kernel,
        out_shape=jax.ShapeDtypeStruct((Bp, Dp), out_dtype),
        grid=grid,
        in_specs=in_specs,
        out_specs=out_specs,
        scratch_shapes=scratch,
        compiler_params=pltpu.CompilerParams(
            dimension_semantics=dims,
            vmem_limit_bytes=vmem_limit,
        ),
        cost_estimate=pl.CostEstimate(
            flops=2 * Bp * Dp * Ep,
            transcendentals=0,
            bytes_accessed=bytes_accessed,
        ),
    )(xp, w_t, b)

    if Bp != B or Dp != D:
        out = out[:B, :D]
    return out


def linear_head(x, weight, bias, **kwargs):
    """Convenience wrapper (prep + apply). For hot loops, call
    prepare_linear_head() once and reuse the params with linear_head_apply()."""
    mxu_dtype = kwargs.pop("mxu_dtype", None)
    tm = kwargs.pop("tm", None)
    params = prepare_linear_head(weight, bias, **kwargs)
    return linear_head_apply(x, params, tm=tm, mxu_dtype=mxu_dtype)


# ---------------------------------------------------------------------------
# Self-test
# ---------------------------------------------------------------------------
if __name__ == "__main__":
    # --- Shipped configuration: embed_size=32, dim_out=2, batch=8 (f32) ---
    batch, embed, dim_out = 8, 32, 2
    kx, kw, kb = jax.random.split(jax.random.PRNGKey(0), 3)
    x = jax.random.normal(kx, (batch, embed), dtype=jnp.float32)
    bound = 1.0 / (embed ** 0.5)
    w = jax.random.uniform(kw, (dim_out, embed), minval=-bound, maxval=bound,
                           dtype=jnp.float32)
    b = jax.random.uniform(kb, (dim_out,), minval=-bound, maxval=bound,
                           dtype=jnp.float32)

    params = prepare_linear_head(w, b)           # one-time transpose/pad
    out = jax.block_until_ready(linear_head_apply(x, params))
    ref = jnp.dot(x, w.T, precision=jax.lax.Precision.HIGHEST) + b
    assert out.shape == (batch, dim_out)
    assert jnp.allclose(out, ref, atol=1e-5, rtol=1e-5), \
        float(jnp.max(jnp.abs(out - ref)))

    # --- Larger configuration: exercises the multi-K accumulator path ---
    B2, E2, D2 = 64, 1024, 384
    k1, k2, k3 = jax.random.split(jax.random.PRNGKey(1), 3)
    x2 = jax.random.normal(k1, (B2, E2), dtype=jnp.float32)
    bnd2 = 1.0 / (E2 ** 0.5)
    w2 = jax.random.uniform(k2, (D2, E2), minval=-bnd2, maxval=bnd2,
                            dtype=jnp.float32)
    b2 = jax.random.uniform(k3, (D2,), minval=-bnd2, maxval=bnd2,
                            dtype=jnp.float32)
    ref2 = jnp.dot(x2, w2.T, precision=jax.lax.Precision.HIGHEST) + b2

    p2 = prepare_linear_head(w2, b2)             # tk=512 -> 2 K steps
    out2 = jax.block_until_ready(linear_head_apply(x2, p2))
    assert out2.shape == (B2, D2)
    assert jnp.allclose(out2, ref2, atol=2e-2, rtol=2e-2), \
        float(jnp.max(jnp.abs(out2 - ref2)))

    # --- bf16 MXU path: bf16 weight stream + in-kernel bf16 cast, f32 accum ---
    p2_bf16 = prepare_linear_head(w2, b2, param_dtype=jnp.bfloat16)
    out2_bf16 = jax.block_until_ready(
        linear_head_apply(x2, p2_bf16, mxu_dtype=jnp.bfloat16))
    assert jnp.allclose(out2_bf16, ref2, atol=3e-2, rtol=3e-2), \
        float(jnp.max(jnp.abs(out2_bf16 - ref2)))

    print("KERNEL_OK")
</pallas_src>

<mosaic_0001>
module attributes {stable_mosaic.version = 11 : i64} {
  func.func @_linear_head_kernel_single(%arg0: i32, %arg1: i32, %arg2: memref<8x32xf32, #tpu.memory_space<vmem>>, %arg3: memref<32x128xf32, #tpu.memory_space<vmem>>, %arg4: memref<1x128xf32, #tpu.memory_space<vmem>>, %arg5: memref<8x128xf32, #tpu.memory_space<vmem>>) attributes {dimension_semantics = [#tpu.dimension_semantics<parallel>, #tpu.dimension_semantics<parallel>], iteration_bounds = array<i64: 1, 1>, scalar_prefetch = 0 : i64, scratch_operands = 0 : i64, tpu.core_type = #tpu.core_type<tc>, window_params = [{transform_indices = @transform_0, window_bounds = array<i64: 8, 32>}, {transform_indices = @transform_1, window_bounds = array<i64: 32, 128>}, {transform_indices = @transform_2, window_bounds = array<i64: 1, 128>}, {transform_indices = @transform_3, window_bounds = array<i64: 8, 128>}]} {
    %c0 = arith.constant 0 : index
    %c0_0 = arith.constant 0 : index
    %0 = vector.load %arg2[%c0, %c0_0] : memref<8x32xf32, #tpu.memory_space<vmem>>, vector<8x32xf32>
    %c0_1 = arith.constant 0 : index
    %c0_2 = arith.constant 0 : index
    %1 = vector.load %arg3[%c0_1, %c0_2] : memref<32x128xf32, #tpu.memory_space<vmem>>, vector<32x128xf32>
    %cst = arith.constant dense<0.000000e+00> : vector<8x128xf32>
    %2 = tpu.matmul %0, %1, %cst {dimension_numbers = #tpu.dot_dimension_numbers<[1], [0], [0], [1], [0, 0, 1, 1], [], []>} : vector<8x32xf32>, vector<32x128xf32>, vector<8x128xf32> -> vector<8x128xf32>
    %c0_3 = arith.constant 0 : index
    %c0_4 = arith.constant 0 : index
    %3 = vector.load %arg4[%c0_3, %c0_4] : memref<1x128xf32, #tpu.memory_space<vmem>>, vector<1x128xf32>
    %4 = vector.broadcast %3 : vector<1x128xf32> to vector<8x128xf32>
    %5 = arith.addf %2, %4 : vector<8x128xf32>
    %c0_5 = arith.constant 0 : index
    %c0_6 = arith.constant 0 : index
    %6 = vector.load %arg5[%c0_5, %c0_6] : memref<8x128xf32, #tpu.memory_space<vmem>>, vector<8x128xf32>
    tpu.vector_store %arg5[%c0_5, %c0_6], %5 {strides = array<i32>} : memref<8x128xf32, #tpu.memory_space<vmem>>, vector<8x128xf32>,
    return
  }
  func.func @transform_0(%arg0: i32, %arg1: i32) -> (i32, i32) {
    %c0_i32 = arith.constant 0 : i32
    %c0_i32_0 = arith.constant 0 : i32
    return %arg0, %c0_i32 : i32, i32
  }
  func.func @transform_1(%arg0: i32, %arg1: i32) -> (i32, i32) {
    %c0_i32 = arith.constant 0 : i32
    %c0_i32_0 = arith.constant 0 : i32
    return %c0_i32, %arg1 : i32, i32
  }
  func.func @transform_2(%arg0: i32, %arg1: i32) -> (i32, i32) {
    %c0_i32 = arith.constant 0 : i32
    %c0_i32_0 = arith.constant 0 : i32
    return %c0_i32, %arg1 : i32, i32
  }
  func.func @transform_3(%arg0: i32, %arg1: i32) -> (i32, i32) {
    %c0_i32 = arith.constant 0 : i32
    return %arg0, %arg1 : i32, i32
  }
}

</mosaic_0001>

<llo_original>
// kernel: tpu_custom_call.1
$region0: #{tpu_custom_call.1}
  #allocation0 [shape = 'u32[]', space=smem, size = 0x4, offset = 0x4, fixed_abs, tag = 'smem constant byte address 0x4 - core index']
  #allocation1 [shape = 'u32[144,128]{1,0:T(1,128)}', space=vmem, size = 0x12000, scoped, tag = 'internal scratch']
  %s0 = inlined_call_operand.hbm [shape: f32[8,32], index: 0, kind: input, shape index: {}]
  %s1 = inlined_call_operand.hbm [shape: f32[32,128], index: 1, kind: input, shape index: {}]
  %s2 = inlined_call_operand.vmem [shape: f32[1,128], index: 2, kind: input, shape index: {}]
  %s3 = inlined_call_operand.hbm [shape: f32[8,128], index: 3, kind: output, shape index: {}]
  %s4 = sld [smem:[#allocation0]]
  $region30: #{tpu_custom_call.1} parent=0
    _
  %s6 = ssub.s32 1, %s4
  %s7 = scalar_select 0, %s6, %s4
  $region1: #{tpu_custom_call.1} parent=0
    #allocation2 [shape = 'u8[4096]{0}', space=vmem, size = 0x1000, scoped, tag = 'input window, operand 0, single buffered']
    #allocation3 [shape = 's32[1]{0}', space=sflag, size = 0x4, scoped, tag = 'scoped memory for tpu_custom_call.1']
    #allocation4 [shape = 's32[1]{0}', space=sflag, size = 0x4, scoped, tag = 'scoped memory for tpu_custom_call.1']
    #allocation5 [shape = 'u8[16384]{0}', space=vmem, size = 0x4000, scoped, tag = 'input window, operand 1, single buffered']
    #allocation6 [shape = 's32[1]{0}', space=sflag, size = 0x4, scoped, tag = 'scoped memory for tpu_custom_call.1']
    #allocation7 [shape = 'u8[4096]{0}', space=vmem, size = 0x1000, scoped, tag = 'output window, operand 0, single buffered']
    %8 = vsyncpa [#allocation3], 0
    %9 = vsyncpa [#allocation6], 0
    %10 = vsyncpa [#allocation4], 0
    // Predicated region
    $region2: #{tpu_custom_call.1} parent=1 // pred_check
      _
    $region3: #{tpu_custom_call.1} parent=1 // pred_check_branch
      %12 = sbr.rel (0) target = $region5
    $region4: #{tpu_custom_call.1} parent=1 // pred_region
      %s14 = ssub.s32 128, 128
      %15 = vsyncadd [#allocation3], %s14
      %s17 = sshll.u32 [#allocation2], 4
      %s18 = int_to_ptr.vmem [resolvable:$true] %s17
      %20 = dma.hbm_to_vmem [thread:$0]  %s0, 128, %s18, [#allocation3]
    $region5: #{tpu_custom_call.1} parent=1 // pred_fallthru
      _
    // Predicated region
    $region6: #{tpu_custom_call.1} parent=1 // pred_check
      _
    $region7: #{tpu_custom_call.1} parent=1 // pred_check_branch
      %22 = sbr.rel (0) target = $region9
    $region8: #{tpu_custom_call.1} parent=1 // pred_region
      %s24 = ssub.s32 512, 512
      %25 = vsyncadd [#allocation6], %s24
      %s26 = sshll.u32 [#allocation5], 4
      %s27 = int_to_ptr.vmem [resolvable:$true] %s26
      %32 = dma.hbm_to_vmem [thread:$0]  %s1, 512, %s27, [#allocation6], 128, 128, 8
    $region9: #{tpu_custom_call.1} parent=1 // pred_fallthru
      _
    // Predicated region
    $region10: #{tpu_custom_call.1} parent=1 // pred_check
      _
    $region11: #{tpu_custom_call.1} parent=1 // pred_check_branch
      %34 = sbr.rel (0) target = $region13
    $region12: #{tpu_custom_call.1} parent=1 // pred_region
      _
    $region13: #{tpu_custom_call.1} parent=1 // pred_fallthru
      _
    // Predicated region
    $region14: #{tpu_custom_call.1} parent=1 // pred_check
      _
    $region15: #{tpu_custom_call.1} parent=1 // pred_check_branch
      %36 = sbr.rel (0) target = $region17
    $region16: #{tpu_custom_call.1} parent=1 // pred_region
      %37 = dma.done [#allocation3], 128
    $region17: #{tpu_custom_call.1} parent=1 // pred_fallthru
      _
    // Predicated region
    $region18: #{tpu_custom_call.1} parent=1 // pred_check
      _
    $region19: #{tpu_custom_call.1} parent=1 // pred_check_branch
      %39 = sbr.rel (0) target = $region21
    $region20: #{tpu_custom_call.1} parent=1 // pred_region
      %40 = dma.done [#allocation6], 512
    $region21: #{tpu_custom_call.1} parent=1 // pred_fallthru
      _
    %v41 = vld [vmem:[#allocation2] sm:$0xff]
    %v42 = vld [vmem:[#allocation5] sm:$0xff]
    %v43 = vld [vmem:[#allocation5 + $0x8] sm:$0xff]
    %v44 = vld [vmem:[#allocation5 + $0x10] sm:$0xff]
    %v45 = vld [vmem:[#allocation5 + $0x18] sm:$0xff]
    %v46 = vld [vmem:[%s2] sm:$0x1]
    %v48 = vlaneseq
    %v49 = vshrl.u32 %v48, 7
    %v50 = vsub.s32 0, %v49
    %v51 = vrot.slane %v46, %v50
    %vm53 = vcmask 261120
    %v55 = vsel %vm53, %v41, 0
    %57 = vmatprep.subr.mxu0 0.0
    %58 = vmatpush1.msra.mxu0 %v42
    %59 = vmatprep.subr.mxu0 0.0
    %60 = vmatpush1.msra.mxu0 %v43
    %61 = vmatprep.subr.mxu0 0.0
    %62 = vmatpush1.msra.mxu0 %v44
    %63 = vmatprep.subr.mxu0 0.0
    %64 = vmatpush1.msra.mxu0 %v45
    %65 = vmatprep.subr.mxu0 0.0
    %66 = vmatpush1.msra.mxu0 0.0
    %67 = vmatprep.subr.mxu0 0.0
    %68 = vmatpush1.msra.mxu0 0.0
    %69 = vmatprep.subr.mxu0 0.0
    %70 = vmatpush1.msra.mxu0 0.0
    %71 = vmatprep.subr.mxu0 0.0
    %72 = vmatpush1.msra.mxu0 0.0
    %73 = vmatprep.subr.mxu0 0.0
    %74 = vmatpush1.msra.mxu0 0.0
    %75 = vmatprep.subr.mxu0 0.0
    %76 = vmatpush1.msra.mxu0 0.0
    %77 = vmatprep.subr.mxu0 0.0
    %78 = vmatpush1.msra.mxu0 0.0
    %79 = vmatprep.subr.mxu0 0.0
    %80 = vmatpush1.msra.mxu0 0.0
    %81 = vmatprep.subr.mxu0 0.0
    %82 = vmatpush1.msra.mxu0 0.0
    %83 = vmatprep.subr.mxu0 0.0
    %84 = vmatpush1.msra.mxu0 0.0
    %85 = vmatprep.subr.mxu0 0.0
    %86 = vmatpush1.msra.mxu0 0.0
    %87 = vmatprep.subr.mxu0 0.0
    %88 = vmatpush1.msra.mxu0 0.0
    %89 = vmatprep.subr.mxu0 0.0
    %90 = vmatpush1.msra.mxu0 0.0
    %91 = vmatprep.subr.mxu0 0.0
    %92 = vmatpush1.msra.mxu0 0.0
    %93 = vmatprep.subr.mxu0 0.0
    %94 = vmatpush1.msra.mxu0 0.0
    %95 = vmatprep.subr.mxu0 0.0
    %96 = vmatpush1.msra.mxu0 0.0
    %97 = vmatprep.subr.mxu0 0.0
    %98 = vmatpush1.msra.mxu0 0.0
    %99 = vmatprep.subr.mxu0 0.0
    %100 = vmatpush1.msra.mxu0 0.0
    %101 = vmatprep.subr.mxu0 0.0
    %102 = vmatpush1.msra.mxu0 0.0
    %103 = vmatprep.subr.mxu0 0.0
    %104 = vmatpush1.msra.mxu0 0.0
    %105 = vmatprep.subr.mxu0 0.0
    %106 = vmatpush1.msra.mxu0 0.0
    %107 = vmatprep.subr.mxu0 0.0
    %108 = vmatpush1.msra.mxu0 0.0
    %109 = vmatprep.subr.mxu0 0.0
    %110 = vmatpush1.msra.mxu0 0.0
    %111 = vmatprep.subr.mxu0 0.0
    %112 = vmatpush1.msra.mxu0 0.0
    %113 = vmatprep.subr.mxu0 0.0
    %114 = vmatpush1.msra.mxu0 0.0
    %115 = vmatprep.subr.mxu0 0.0
    %116 = vmatpush1.msra.mxu0 0.0
    %117 = vmatprep.subr.mxu0 0.0
    %118 = vmatpush1.msra.mxu0 0.0
    %119 = vmatprep.subr.mxu0 0.0
    %120 = vmatpush1.msra.mxu0 0.0
    %121 = vmatprep.mubr.f32.mxu0 0.0
    %122 = vmatmul.mubr.f32.gmra.mrb[0].mxu0 %v55
    %v123 = vpop.f32.mrb[0].mxu0
    %v124 = vadd.f32 %v51, %v123
    %v125 = vpop.f32.mrb[0].mxu0
    %126 = vdwg.mxu0
    %127 = vst [vmem:[#allocation7] sm:$0xff] %v124
    // Predicated region
    $region22: #{tpu_custom_call.1} parent=1 // pred_check
      _
    $region23: #{tpu_custom_call.1} parent=1 // pred_check_branch
      %129 = sbr.rel (0) target = $region25
    $region24: #{tpu_custom_call.1} parent=1 // pred_region
      %s131 = ssub.s32 128, 128
      %132 = vsyncadd [#allocation4], %s131
      %s134 = sshll.u32 [#allocation7], 4
      %s135 = int_to_ptr.vmem [resolvable:$true] %s134
      %137 = dma.vmem_to_hbm [thread:$0]  %s135, 128, %s3, [#allocation4]
    $region25: #{tpu_custom_call.1} parent=1 // pred_fallthru
      _
    // Predicated region
    $region26: #{tpu_custom_call.1} parent=1 // pred_check
      _
    $region27: #{tpu_custom_call.1} parent=1 // pred_check_branch
      %139 = sbr.rel (0) target = $region29
    $region28: #{tpu_custom_call.1} parent=1 // pred_region
      %140 = dma.done [#allocation4], 128
    $region29: #{tpu_custom_call.1} parent=1 // pred_fallthru
      _
    %141 = vsyncpa [#allocation3], 1
    %142 = vsyncpa [#allocation6], 1
    %143 = vsyncpa [#allocation4], 1

</llo_original>
